<compile_context>
chip_gen: v7x
topology: tpu7x:2x2x1
jax: 0.10.0
libtpu: 0.0.40
codegen_flags: <defaults>
</compile_context>

<pallas_src>
import jax
import jax.numpy as jnp
from jax.experimental import pallas as pl
from jax.experimental.pallas import tpu as pltpu

LANE = 128
_MIN_KERNEL_BYTES = 1 << 20  # below this, fused XLA multiply beats launch cost


def _scale_kernel(scale_ref, x_ref, o_ref):
    # One scalar load (free in the scalar slot) + one VPU multiply per vreg.
    s = scale_ref[0, 0]
    o_ref[...] = (x_ref[...] * s).astype(o_ref.dtype)


def _chip_params():
    """(vmem_limit_bytes, target_tile_bytes, num_tensorcores) per generation."""
    try:
        kind = jax.devices()[0].device_kind.lower()
    except Exception:  # pragma: no cover - defensive; fall back to safe tiling
        kind = ""
    if "v7" in kind:
        # 64 MiB VMEM/TC, ~3.2 TB/s HBM, 2 TCs/chip. 8 MiB tiles => ~32 MiB
        # double-buffered footprint, cap at 48 MiB for compiler headroom.
        return 48 << 20, 8 << 20, 2
    if "v6" in kind:
        # 128 MiB VMEM, ~1.4 TB/s HBM, 1 TC. Bigger tiles are free here.
        return 64 << 20, 8 << 20, 1
    # v5e & unknown: ~0.8 TB/s HBM so 4 MiB tiles already amortize the
    # ~0.35us/step overhead; the explicit 32 MiB limit (default scoped is
    # 16 MiB) is what matters.
    return 32 << 20, 4 << 20, 1


def _scale_2d(x2d: jax.Array, scale_arr: jax.Array) -> jax.Array:
    rows, lanes = x2d.shape
    itemsize = jnp.dtype(x2d.dtype).itemsize
    # Sublane packing: 8 for 4-byte, 16 for 2-byte, 32 for 1-byte dtypes.
    pack = max(8, 32 // itemsize)
    bytes_per_row = lanes * itemsize

    vmem_limit, target_tile_bytes, num_tc = _chip_params()

    tile_rows = max(pack, (target_tile_bytes // bytes_per_row) // pack * pack)

    if rows <= tile_rows:
        if num_tc >= 2 and rows >= 2 * pack:
            # v7x: split small inputs across both TensorCores.
            per_core = pl.cdiv(rows, num_tc)
            tile_rows = max(pack, pl.cdiv(per_core, pack) * pack)
        else:
            # Single-TC chips: one full-extent block (always layout-legal).
            tile_rows = rows
    else:
        # Prefer a tile_rows that evenly divides rows (no masked partial tail).
        cand, scanned = tile_rows, 0
        while cand >= pack and scanned < 512:
            if rows % cand == 0:
                tile_rows = cand
                break
            cand -= pack
            scanned += 1
        # On 2-TC chips, round the step count up to a multiple of the TC count
        # so the "parallel" axis load-balances across cores.
        if num_tc >= 2:
            n_steps = pl.cdiv(rows, tile_rows)
            if n_steps % num_tc != 0:
                n_steps = pl.cdiv(n_steps, num_tc) * num_tc
                tile_rows = max(pack, pl.cdiv(pl.cdiv(rows, n_steps), pack) * pack)

    grid = (pl.cdiv(rows, tile_rows),)

    return pl.pallas_call(
        _scale_kernel,
        out_shape=jax.ShapeDtypeStruct((rows, lanes), x2d.dtype),
        grid=grid,
        in_specs=[
            pl.BlockSpec(memory_space=pltpu.MemorySpace.SMEM),  # scale scalar
            pl.BlockSpec((tile_rows, lanes), lambda i: (i, 0)),
        ],
        out_specs=pl.BlockSpec((tile_rows, lanes), lambda i: (i, 0)),
        compiler_params=pltpu.CompilerParams(
            dimension_semantics=("parallel",),
            vmem_limit_bytes=vmem_limit,
        ),
    )(scale_arr, x2d)


def scale_const(x: jax.Array, scale: float, *,
                min_kernel_bytes: int = _MIN_KERNEL_BYTES) -> jax.Array:
    """Apply y = scale * x. Pallas kernel for large float inputs, fused XLA
    multiply for tiny / ragged / non-float ones."""
    orig_shape = x.shape
    total = x.size
    dtype = x.dtype
    nbytes = total * jnp.dtype(dtype).itemsize

    if (total == 0
            or not jnp.issubdtype(dtype, jnp.floating)
            or total % LANE != 0
            or nbytes < min_kernel_bytes):
        # Fast path: a single fused XLA multiply (also gives PyTorch's
        # int -> float promotion for integer inputs).
        return scale * x

    rows = total // LANE
    scale_arr = jnp.full((1, 1), scale, dtype=jnp.float32)
    out2d = _scale_2d(x.reshape(rows, LANE), scale_arr)
    return out2d.reshape(orig_shape)


if __name__ == "__main__":
    key = jax.random.PRNGKey(0)
    # NCHW input, small shape consistent with a conv-net feature map.
    x = jax.random.normal(key, (2, 4, 16, 16), dtype=jnp.float32)
    scale = 0.7  # the module's constructor constant

    # Exercise the Pallas kernel path explicitly (this input is tiny, so the
    # default dispatch would take the fused-XLA fast path).
    y_kernel = jax.block_until_ready(scale_const(x, scale, min_kernel_bytes=0))
    # Default dispatch (tiny input -> plain fused multiply).
    y_fast = jax.block_until_ready(scale_const(x, scale))

    ref = scale * x
    assert y_kernel.shape == x.shape and y_kernel.dtype == x.dtype
    assert jnp.allclose(y_kernel, ref, atol=1e-6, rtol=1e-6)
    assert jnp.allclose(y_fast, ref, atol=1e-6, rtol=1e-6)

    print("KERNEL_OK")
</pallas_src>

<mosaic_0001>
module attributes {stable_mosaic.version = 11 : i64} {
  func.func @_scale_kernel(%arg0: i32, %arg1: memref<1x1xf32, #tpu.memory_space<smem>>, %arg2: memref<16x128xf32, #tpu.memory_space<vmem>>, %arg3: memref<16x128xf32, #tpu.memory_space<vmem>>) attributes {dimension_semantics = [#tpu.dimension_semantics<parallel>], iteration_bounds = array<i64: 1>, scalar_prefetch = 0 : i64, scratch_operands = 0 : i64, tpu.core_type = #tpu.core_type<tc>, window_params = [{transform_indices = @transform_0, window_bounds = array<i64: 1, 1>}, {transform_indices = @transform_1, window_bounds = array<i64: 16, 128>}, {transform_indices = @transform_2, window_bounds = array<i64: 16, 128>}]} {
    %c0 = arith.constant 0 : index
    %c0_0 = arith.constant 0 : index
    %0 = memref.load %arg1[%c0, %c0_0] : memref<1x1xf32, #tpu.memory_space<smem>>
    %c0_1 = arith.constant 0 : index
    %c0_2 = arith.constant 0 : index
    %1 = vector.load %arg2[%c0_1, %c0_2] : memref<16x128xf32, #tpu.memory_space<vmem>>, vector<16x128xf32>
    %2 = vector.broadcast %0 : f32 to vector<16x128xf32>
    %3 = arith.mulf %1, %2 : vector<16x128xf32>
    %c0_3 = arith.constant 0 : index
    %c0_4 = arith.constant 0 : index
    %4 = vector.load %arg3[%c0_3, %c0_4] : memref<16x128xf32, #tpu.memory_space<vmem>>, vector<16x128xf32>
    tpu.vector_store %arg3[%c0_3, %c0_4], %3 {strides = array<i32>} : memref<16x128xf32, #tpu.memory_space<vmem>>, vector<16x128xf32>,
    return
  }
  func.func @transform_0(%arg0: i32) -> (i32, i32) {
    %c0_i32 = arith.constant 0 : i32
    %c0_i32_0 = arith.constant 0 : i32
    %c0_i32_1 = arith.constant 0 : i32
    return %c0_i32, %c0_i32_0 : i32, i32
  }
  func.func @transform_1(%arg0: i32) -> (i32, i32) {
    %c0_i32 = arith.constant 0 : i32
    %c0_i32_0 = arith.constant 0 : i32
    return %arg0, %c0_i32 : i32, i32
  }
  func.func @transform_2(%arg0: i32) -> (i32, i32) {
    %c0_i32 = arith.constant 0 : i32
    %c0_i32_0 = arith.constant 0 : i32
    return %arg0, %c0_i32 : i32, i32
  }
}

</mosaic_0001>

<llo_original>
// kernel: tpu_custom_call.1
$region0: #{tpu_custom_call.1}
  #allocation0 [shape = 'u32[]', space=smem, size = 0x4, offset = 0x4, fixed_abs, tag = 'smem constant byte address 0x4 - core index']
  #allocation1 [shape = 'u32[144,128]{1,0:T(1,128)}', space=vmem, size = 0x12000, scoped, tag = 'internal scratch']
  #allocation2 [shape = 'f32[1,1]{1,0:T(1,128)S(6)}', space=smem, size = 0x200, scoped, tag = 'scoped memory for tpu_custom_call.1']
  %s0 = inlined_call_operand.<no memory space> [shape: f32[1,1], index: 0, kind: input, shape index: {}]
  %s1 = inlined_call_operand.hbm [shape: f32[16,128], index: 1, kind: input, shape index: {}]
  %s2 = inlined_call_operand.hbm [shape: f32[16,128], index: 2, kind: output, shape index: {}]
  %s3 = sld [smem:[#allocation0]]
  $region22: #{tpu_custom_call.1} parent=0
    _
  %s5 = ssub.s32 1, %s3
  %s6 = scalar_select 0, %s5, %s3
  %7 = sst [smem:[#allocation2]] %s0
  $region1: #{tpu_custom_call.1} parent=0
    #allocation3 [shape = 'u8[8192]{0}', space=vmem, size = 0x2000, scoped, tag = 'input window, operand 1, single buffered']
    #allocation4 [shape = 's32[1]{0}', space=sflag, size = 0x4, scoped, tag = 'scoped memory for tpu_custom_call.1']
    #allocation5 [shape = 's32[1]{0}', space=sflag, size = 0x4, scoped, tag = 'scoped memory for tpu_custom_call.1']
    #allocation6 [shape = 'u8[8192]{0}', space=vmem, size = 0x2000, scoped, tag = 'output window, operand 0, single buffered']
    %8 = vsyncpa [#allocation4], 0
    %9 = vsyncpa [#allocation5], 0
    // Predicated region
    $region2: #{tpu_custom_call.1} parent=1 // pred_check
      _
    $region3: #{tpu_custom_call.1} parent=1 // pred_check_branch
      %11 = sbr.rel (0) target = $region5
    $region4: #{tpu_custom_call.1} parent=1 // pred_region
      _
    $region5: #{tpu_custom_call.1} parent=1 // pred_fallthru
      _
    // Predicated region
    $region6: #{tpu_custom_call.1} parent=1 // pred_check
      _
    $region7: #{tpu_custom_call.1} parent=1 // pred_check_branch
      %13 = sbr.rel (0) target = $region9
    $region8: #{tpu_custom_call.1} parent=1 // pred_region
      %s15 = ssub.s32 256, 256
      %16 = vsyncadd [#allocation4], %s15
      %s17 = sshll.u32 [#allocation3], 4
      %s18 = int_to_ptr.vmem [resolvable:$true] %s17
      %23 = dma.hbm_to_vmem [thread:$0]  %s1, 256, %s18, [#allocation4], 128, 128, 8
    $region9: #{tpu_custom_call.1} parent=1 // pred_fallthru
      _
    // Predicated region
    $region10: #{tpu_custom_call.1} parent=1 // pred_check
      _
    $region11: #{tpu_custom_call.1} parent=1 // pred_check_branch
      %25 = sbr.rel (0) target = $region13
    $region12: #{tpu_custom_call.1} parent=1 // pred_region
      %26 = dma.done [#allocation4], 256
    $region13: #{tpu_custom_call.1} parent=1 // pred_fallthru
      _
    %s27 = sld [smem:[#allocation2]]
    %v28 = vld [vmem:[#allocation3] sm:$0xff]
    %v29 = vld [vmem:[#allocation3 + $0x8] sm:$0xff]
    %v30 = vstv %s27
    %v31 = vmul.f32 %v28, %v30
    %v32 = vmul.f32 %v29, %v30
    %33 = vst [vmem:[#allocation6] sm:$0xff] %v31
    %34 = vst [vmem:[#allocation6 + $0x8] sm:$0xff] %v32
    // Predicated region
    $region14: #{tpu_custom_call.1} parent=1 // pred_check
      _
    $region15: #{tpu_custom_call.1} parent=1 // pred_check_branch
      %36 = sbr.rel (0) target = $region17
    $region16: #{tpu_custom_call.1} parent=1 // pred_region
      %s38 = ssub.s32 256, 256
      %39 = vsyncadd [#allocation5], %s38
      %s40 = sshll.u32 [#allocation6], 4
      %s41 = int_to_ptr.vmem [resolvable:$true] %s40
      %46 = dma.vmem_to_hbm [thread:$0]  %s41, 256, %s2, [#allocation5], 128, 128, 8
    $region17: #{tpu_custom_call.1} parent=1 // pred_fallthru
      _
    // Predicated region
    $region18: #{tpu_custom_call.1} parent=1 // pred_check
      _
    $region19: #{tpu_custom_call.1} parent=1 // pred_check_branch
      %48 = sbr.rel (0) target = $region21
    $region20: #{tpu_custom_call.1} parent=1 // pred_region
      %49 = dma.done [#allocation5], 256
    $region21: #{tpu_custom_call.1} parent=1 // pred_fallthru
      _
    %50 = vsyncpa [#allocation4], 1
    %51 = vsyncpa [#allocation5], 1

</llo_original>
